<compile_context>
chip_gen: v7x
topology: tpu7x:2x2x1
jax: 0.10.0
libtpu: 0.0.40
codegen_flags: <defaults>
</compile_context>

<pallas_src>
import functools

import jax
import jax.numpy as jnp
from jax.experimental import pallas as pl
from jax.experimental.pallas import tpu as pltpu

LEAKY_ALPHA = 0.2      # LeakyReLU negative slope (module default alpha=0.2)
NEG_BIG = -9e15        # matches -9000000000000000.0 in the reference


def _pick_tile(n, target, align):
    """Largest tile <= target that divides n and is a multiple of `align`;
    falls back to the full dimension (always legal for a BlockSpec)."""
    if n <= target:
        return n
    t = (target // align) * align
    while t >= align:
        if n % t == 0:
            return t
        t -= align
    return n


def _gat_kernel(hq_ref, hkv_ref, adj_ref, wf_ref, wa1_ref, wa2t_ref,
                out_ref, m_sc, l_sc, acc_sc, *, n_heads, f_out):
    kv = pl.program_id(1)
    n_kv = pl.num_programs(1)

    @pl.when(kv == 0)
    def _init():
        m_sc[...] = jnp.full_like(m_sc, -jnp.inf)
        l_sc[...] = jnp.zeros_like(l_sc)
        acc_sc[...] = jnp.zeros_like(acc_sc)

    hq = hq_ref[...]              # (TQ,  F_in) f32 query-row tile
    hkv = hkv_ref[...]            # (TKV, F_in) f32 KV-row tile
    mask = adj_ref[...] > 0.0     # (TQ,  TKV)

    # Per-head score terms (f32, tiny MXU ops, no transposes):
    #   e_i[q, h] = (h_q  @ W_h @ a1_h)[q]      -> columns of (TQ, H)
    #   e_j[h, k] = (h_kv @ W_h @ a2_h)[k]      -> rows    of (H, TKV)
    e_i = jnp.dot(hq, wa1_ref[...], preferred_element_type=jnp.float32)
    e_j = jax.lax.dot_general(
        wa2t_ref[...], hkv,
        dimension_numbers=(((1,), (1,)), ((), ())),
        preferred_element_type=jnp.float32)

    # Fused all-head value projection of the KV rows: one lane-dense bf16 matmul.
    wh_kv = jnp.dot(hkv.astype(jnp.bfloat16), wf_ref[...],
                    preferred_element_type=jnp.float32)        # (TKV, H*F_out)
    wh_kv = wh_kv.astype(jnp.bfloat16)

    for h in range(n_heads):
        e = e_i[:, h:h + 1] + e_j[h:h + 1, :]                  # (TQ, TKV)
        e = jnp.where(e > 0, e, LEAKY_ALPHA * e)               # LeakyReLU
        s = jnp.where(mask, e, NEG_BIG)                        # adjacency mask

        m_prev = m_sc[h]                                       # (TQ, 1)
        m_new = jnp.maximum(m_prev, jnp.max(s, axis=1, keepdims=True))
        corr = jnp.exp(m_prev - m_new)
        p = jnp.exp(s - m_new)                                 # (TQ, TKV) f32
        l_sc[h] = corr * l_sc[h] + jnp.sum(p, axis=1, keepdims=True)
        v_h = wh_kv[:, h * f_out:(h + 1) * f_out]              # (TKV, F_out) bf16
        acc_sc[h] = corr * acc_sc[h] + jnp.dot(
            p.astype(jnp.bfloat16), v_h, preferred_element_type=jnp.float32)
        m_sc[h] = m_new

    @pl.when(kv == n_kv - 1)
    def _finalize():
        for h in range(n_heads):
            inv_l = pl.reciprocal(l_sc[h], approx=True)        # EUP vrcp
            hp = acc_sc[h] * inv_l                             # (TQ, F_out)
            out = jnp.where(hp > 0, hp, jnp.exp(jnp.minimum(hp, 0.0)) - 1.0)
            out_ref[:, h * f_out:(h + 1) * f_out] = out.astype(out_ref.dtype)
    # TODO(synk): nn.Dropout(0.1) on attention is identity here (eval-mode
    # semantics); no stochastic dropout inside the kernel.


def multi_head_gat(h, adj, W, a, *, tq_target=256, tkv_target=512):
    """h: (N, F_in), adj: (N, N), W: (H, F_in, F_out), a: (H, 2*F_out, 1).
    Returns (N, H * F_out), identical layout to torch.cat(head_outputs, dim=1)."""
    n_heads, f_in, f_out = W.shape
    n = h.shape[0]

    # One-time parameter folding (tiny): fused projection weight, and the two
    # attention vectors pre-multiplied by W so the kernel needs no e_j transpose.
    wf = jnp.transpose(W, (1, 0, 2)).reshape(f_in, n_heads * f_out)
    wf = wf.astype(jnp.bfloat16)                                  # (F_in, H*F_out)
    a1 = a[:, :f_out, 0]                                          # (H, F_out)
    a2 = a[:, f_out:, 0]                                          # (H, F_out)
    wa1 = jnp.einsum('hio,ho->ih', W, a1).astype(jnp.float32)     # (F_in, H)
    wa2t = jnp.einsum('hio,ho->hi', W, a2).astype(jnp.float32)    # (H, F_in)

    tq = _pick_tile(n, tq_target, 8)       # sublane-aligned row tile
    tkv = _pick_tile(n, tkv_target, 128)   # lane-aligned KV tile
    grid = (n // tq, n // tkv)

    kernel = functools.partial(_gat_kernel, n_heads=n_heads, f_out=f_out)

    return pl.pallas_call(
        kernel,
        out_shape=jax.ShapeDtypeStruct((n, n_heads * f_out), jnp.float32),
        grid_spec=pltpu.PrefetchScalarGridSpec(
            num_scalar_prefetch=0,
            grid=grid,
            in_specs=[
                pl.BlockSpec((tq, f_in), lambda q, k: (q, 0)),      # h (query rows)
                pl.BlockSpec((tkv, f_in), lambda q, k: (k, 0)),     # h (KV rows)
                pl.BlockSpec((tq, tkv), lambda q, k: (q, k)),       # adj tile
                pl.BlockSpec((f_in, n_heads * f_out), lambda q, k: (0, 0)),  # Wf
                pl.BlockSpec((f_in, n_heads), lambda q, k: (0, 0)),          # W@a1
                pl.BlockSpec((n_heads, f_in), lambda q, k: (0, 0)),          # (W@a2)^T
            ],
            out_specs=pl.BlockSpec((tq, n_heads * f_out), lambda q, k: (q, 0)),
            scratch_shapes=[
                pltpu.VMEM((n_heads, tq, 1), jnp.float32),      # running row max
                pltpu.VMEM((n_heads, tq, 1), jnp.float32),      # running row sum
                pltpu.VMEM((n_heads, tq, f_out), jnp.float32),  # output accumulator
            ],
        ),
        compiler_params=pltpu.CompilerParams(
            dimension_semantics=("parallel", "arbitrary")),
    )(h, h, adj, wf, wa1, wa2t)


def xavier_uniform(key, shape, gain):
    fan_in, fan_out = shape[-2], shape[-1]
    bound = gain * (6.0 / (fan_in + fan_out)) ** 0.5
    return jax.random.uniform(key, shape, jnp.float32, -bound, bound)


if __name__ == "__main__":
    # Small, deterministic configuration (H * F_out = 128 -> lane-dense output).
    N, F_IN, F_OUT, N_HEADS = 8, 16, 32, 4
    GAIN = 1.414

    key = jax.random.PRNGKey(0)
    k_h, k_adj, k_w, k_a = jax.random.split(key, 4)

    # Inputs.
    h = jax.random.normal(k_h, (N, F_IN), dtype=jnp.float32)
    adj = (jax.random.uniform(k_adj, (N, N)) > 0.5).astype(jnp.float32)
    adj = jnp.maximum(adj, jnp.eye(N, dtype=jnp.float32))  # self-loops

    # Per-head parameters (xavier_uniform with gain=1.414, as in __init__).
    W = xavier_uniform(k_w, (N_HEADS, F_IN, F_OUT), GAIN)
    a = xavier_uniform(k_a, (N_HEADS, 2 * F_OUT, 1), GAIN)

    out = multi_head_gat(h, adj, W, a)
    jax.block_until_ready(out)
    assert out.shape == (N, N_HEADS * F_OUT)

    # Pure-JAX f32 reference of one forward pass (kernel uses bf16 MXU operands
    # and an approx reciprocal, hence the relaxed tolerance).
    def ref_head(hh, aa, W_h, a_h):
        wh = hh @ W_h
        e = wh @ a_h[:F_OUT] + (wh @ a_h[F_OUT:]).T
        e = jnp.where(e > 0, e, LEAKY_ALPHA * e)
        masked = jnp.where(aa > 0, e, NEG_BIG)
        attn = jax.nn.softmax(masked, axis=1)
        hp = attn @ wh
        return jnp.where(hp > 0, hp, jnp.exp(jnp.minimum(hp, 0.0)) - 1.0)

    ref = jnp.concatenate(
        [ref_head(h, adj, W[i], a[i]) for i in range(N_HEADS)], axis=1)
    assert jnp.allclose(out, ref, atol=2e-2, rtol=2e-2), (
        float(jnp.max(jnp.abs(out - ref))))

    print("KERNEL_OK")
</pallas_src>

<mosaic_0001>
module attributes {stable_mosaic.version = 11 : i64} {
  func.func @_gat_kernel(%arg0: i32, %arg1: i32, %arg2: memref<8x16xf32, #tpu.memory_space<vmem>>, %arg3: memref<8x16xf32, #tpu.memory_space<vmem>>, %arg4: memref<8x8xf32, #tpu.memory_space<vmem>>, %arg5: memref<16x128xbf16, #tpu.memory_space<vmem>>, %arg6: memref<16x4xf32, #tpu.memory_space<vmem>>, %arg7: memref<4x16xf32, #tpu.memory_space<vmem>>, %arg8: memref<8x128xf32, #tpu.memory_space<vmem>>, %arg9: memref<4x8x1xf32, #tpu.memory_space<vmem>>, %arg10: memref<4x8x1xf32, #tpu.memory_space<vmem>>, %arg11: memref<4x8x32xf32, #tpu.memory_space<vmem>>) attributes {dimension_semantics = [#tpu.dimension_semantics<parallel>, #tpu.dimension_semantics<arbitrary>], iteration_bounds = array<i64: 1, 1>, scalar_prefetch = 0 : i64, scratch_operands = 3 : i64, tpu.core_type = #tpu.core_type<tc>, window_params = [{transform_indices = @transform_0, window_bounds = array<i64: 8, 16>}, {transform_indices = @transform_1, window_bounds = array<i64: 8, 16>}, {transform_indices = @transform_2, window_bounds = array<i64: 8, 8>}, {pipeline_mode = #tpu.pipeline_mode<synchronous>, transform_indices = @transform_3, window_bounds = array<i64: 16, 128>}, {pipeline_mode = #tpu.pipeline_mode<synchronous>, transform_indices = @transform_4, window_bounds = array<i64: 16, 4>}, {pipeline_mode = #tpu.pipeline_mode<synchronous>, transform_indices = @transform_5, window_bounds = array<i64: 4, 16>}, {transform_indices = @transform_6, window_bounds = array<i64: 8, 128>}]} {
    %c0_i32 = arith.constant 0 : i32
    %0 = arith.cmpi eq, %arg1, %c0_i32 : i32
    %1 = arith.extui %0 : i1 to i32
    %c0_i32_0 = arith.constant 0 : i32
    %2 = arith.cmpi ne, %1, %c0_i32_0 : i32
    scf.if %2 {
      %cst_110 = arith.constant 0xFF800000 : f32
      %199 = vector.broadcast %cst_110 : f32 to vector<4x8x1xf32>
      %c0_111 = arith.constant 0 : index
      %c0_112 = arith.constant 0 : index
      %c0_113 = arith.constant 0 : index
      %200 = vector.load %arg9[%c0_111, %c0_112, %c0_113] : memref<4x8x1xf32, #tpu.memory_space<vmem>>, vector<4x8x1xf32>
      tpu.vector_store %arg9[%c0_111, %c0_112, %c0_113], %199 {strides = array<i32>} : memref<4x8x1xf32, #tpu.memory_space<vmem>>, vector<4x8x1xf32>,
      %cst_114 = arith.constant 0.000000e+00 : f32
      %201 = vector.broadcast %cst_114 : f32 to vector<4x8x1xf32>
      %c0_115 = arith.constant 0 : index
      %c0_116 = arith.constant 0 : index
      %c0_117 = arith.constant 0 : index
      %202 = vector.load %arg10[%c0_115, %c0_116, %c0_117] : memref<4x8x1xf32, #tpu.memory_space<vmem>>, vector<4x8x1xf32>
      tpu.vector_store %arg10[%c0_115, %c0_116, %c0_117], %201 {strides = array<i32>} : memref<4x8x1xf32, #tpu.memory_space<vmem>>, vector<4x8x1xf32>,
      %cst_118 = arith.constant 0.000000e+00 : f32
      %203 = vector.broadcast %cst_118 : f32 to vector<4x8x32xf32>
      %c0_119 = arith.constant 0 : index
      %c0_120 = arith.constant 0 : index
      %c0_121 = arith.constant 0 : index
      %204 = vector.load %arg11[%c0_119, %c0_120, %c0_121] : memref<4x8x32xf32, #tpu.memory_space<vmem>>, vector<4x8x32xf32>
      tpu.vector_store %arg11[%c0_119, %c0_120, %c0_121], %203 {strides = array<i32>} : memref<4x8x32xf32, #tpu.memory_space<vmem>>, vector<4x8x32xf32>,
    } else {
    }
    %c0 = arith.constant 0 : index
    %c0_1 = arith.constant 0 : index
    %3 = vector.load %arg2[%c0, %c0_1] : memref<8x16xf32, #tpu.memory_space<vmem>>, vector<8x16xf32>
    %c0_2 = arith.constant 0 : index
    %c0_3 = arith.constant 0 : index
    %4 = vector.load %arg3[%c0_2, %c0_3] : memref<8x16xf32, #tpu.memory_space<vmem>>, vector<8x16xf32>
    %c0_4 = arith.constant 0 : index
    %c0_5 = arith.constant 0 : index
    %5 = vector.load %arg4[%c0_4, %c0_5] : memref<8x8xf32, #tpu.memory_space<vmem>>, vector<8x8xf32>
    %cst = arith.constant 0.000000e+00 : f32
    %6 = vector.broadcast %cst : f32 to vector<8x8xf32>
    %7 = arith.cmpf ogt, %5, %6 : vector<8x8xf32>
    %c0_6 = arith.constant 0 : index
    %c0_7 = arith.constant 0 : index
    %8 = vector.load %arg6[%c0_6, %c0_7] : memref<16x4xf32, #tpu.memory_space<vmem>>, vector<16x4xf32>
    %cst_8 = arith.constant dense<0.000000e+00> : vector<8x4xf32>
    %9 = tpu.matmul %3, %8, %cst_8 {dimension_numbers = #tpu.dot_dimension_numbers<[1], [0], [0], [1], [0, 0, 1, 1], [], []>} : vector<8x16xf32>, vector<16x4xf32>, vector<8x4xf32> -> vector<8x4xf32>
    %c0_9 = arith.constant 0 : index
    %c0_10 = arith.constant 0 : index
    %10 = vector.load %arg7[%c0_9, %c0_10] : memref<4x16xf32, #tpu.memory_space<vmem>>, vector<4x16xf32>
    %cst_11 = arith.constant dense<0.000000e+00> : vector<4x8xf32>
    %11 = tpu.matmul %10, %4, %cst_11 {dimension_numbers = #tpu.dot_dimension_numbers<[1], [1], [0], [0], [0, 0, 1, 0], [], []>} : vector<4x16xf32>, vector<8x16xf32>, vector<4x8xf32> -> vector<4x8xf32>
    %12 = arith.truncf %4 : vector<8x16xf32> to vector<8x16xbf16>
    %c0_12 = arith.constant 0 : index
    %c0_13 = arith.constant 0 : index
    %13 = vector.load %arg5[%c0_12, %c0_13] : memref<16x128xbf16, #tpu.memory_space<vmem>>, vector<16x128xbf16>
    %cst_14 = arith.constant dense<0.000000e+00> : vector<8x128xf32>
    %14 = tpu.matmul %12, %13, %cst_14 {dimension_numbers = #tpu.dot_dimension_numbers<[1], [0], [0], [1], [0, 0, 1, 1], [], []>} : vector<8x16xbf16>, vector<16x128xbf16>, vector<8x128xf32> -> vector<8x128xf32>
    %15 = arith.truncf %14 : vector<8x128xf32> to vector<8x128xbf16>
    %16 = vector.extract_strided_slice %9 {offsets = [0, 0], sizes = [8, 1], strides = [1, 1]} : vector<8x4xf32> to vector<8x1xf32>
    %17 = vector.extract_strided_slice %11 {offsets = [0, 0], sizes = [1, 8], strides = [1, 1]} : vector<4x8xf32> to vector<1x8xf32>
    %18 = vector.broadcast %16 : vector<8x1xf32> to vector<8x8xf32>
    %19 = vector.broadcast %17 : vector<1x8xf32> to vector<8x8xf32>
    %20 = arith.addf %18, %19 : vector<8x8xf32>
    %cst_15 = arith.constant 0.000000e+00 : f32
    %21 = vector.broadcast %cst_15 : f32 to vector<8x8xf32>
    %22 = arith.cmpf ogt, %20, %21 : vector<8x8xf32>
    %cst_16 = arith.constant 2.000000e-01 : f32
    %23 = vector.broadcast %cst_16 : f32 to vector<8x8xf32>
    %24 = arith.mulf %23, %20 : vector<8x8xf32>
    %25 = arith.select %22, %20, %24 : vector<8x8xi1>, vector<8x8xf32>
    %cst_17 = arith.constant -9.000000e+15 : f32
    %26 = vector.broadcast %cst_17 : f32 to vector<8x8xf32>
    %27 = arith.select %7, %25, %26 : vector<8x8xi1>, vector<8x8xf32>
    %c0_18 = arith.constant 0 : index
    %c0_19 = arith.constant 0 : index
    %c0_20 = arith.constant 0 : index
    %28 = vector.load %arg9[%c0_18, %c0_19, %c0_20] : memref<4x8x1xf32, #tpu.memory_space<vmem>>, vector<1x8x1xf32>
    %29 = vector.shape_cast %28 : vector<1x8x1xf32> to vector<8x1xf32>
    %cst_21 = arith.constant dense<0xFF800000> : vector<8xf32>
    %30 = vector.multi_reduction <maximumf>, %27, %cst_21 [1] : vector<8x8xf32> to vector<8xf32>
    %31 = vector.shape_cast %30 : vector<8xf32> to vector<8x1xf32>
    %32 = arith.maximumf %29, %31 : vector<8x1xf32>
    %33 = arith.subf %29, %32 : vector<8x1xf32>
    %34 = math.exp %33 : vector<8x1xf32>
    %35 = vector.broadcast %32 : vector<8x1xf32> to vector<8x8xf32>
    %36 = arith.subf %27, %35 : vector<8x8xf32>
    %37 = math.exp %36 : vector<8x8xf32>
    %c0_22 = arith.constant 0 : index
    %c0_23 = arith.constant 0 : index
    %c0_24 = arith.constant 0 : index
    %38 = vector.load %arg10[%c0_22, %c0_23, %c0_24] : memref<4x8x1xf32, #tpu.memory_space<vmem>>, vector<1x8x1xf32>
    %39 = vector.shape_cast %38 : vector<1x8x1xf32> to vector<8x1xf32>
    %40 = arith.mulf %34, %39 : vector<8x1xf32>
    %cst_25 = arith.constant dense<0.000000e+00> : vector<8xf32>
    %41 = vector.multi_reduction <add>, %37, %cst_25 [1] : vector<8x8xf32> to vector<8xf32>
    %42 = vector.shape_cast %41 : vector<8xf32> to vector<8x1xf32>
    %43 = arith.addf %40, %42 : vector<8x1xf32>
    %c0_26 = arith.constant 0 : index
    %c0_27 = arith.constant 0 : index
    %c0_28 = arith.constant 0 : index
    %44 = vector.load %arg10[%c0_26, %c0_27, %c0_28] : memref<4x8x1xf32, #tpu.memory_space<vmem>>, vector<1x8x1xf32>
    %45 = vector.shape_cast %44 : vector<1x8x1xf32> to vector<8x1xf32>
    %46 = vector.shape_cast %43 : vector<8x1xf32> to vector<1x8x1xf32>
    tpu.vector_store %arg10[%c0_26, %c0_27, %c0_28], %46 {strides = array<i32>} : memref<4x8x1xf32, #tpu.memory_space<vmem>>, vector<1x8x1xf32>,
    %47 = vector.extract_strided_slice %15 {offsets = [0, 0], sizes = [8, 32], strides = [1, 1]} : vector<8x128xbf16> to vector<8x32xbf16>
    %c0_29 = arith.constant 0 : index
    %c0_30 = arith.constant 0 : index
    %c0_31 = arith.constant 0 : index
    %48 = vector.load %arg11[%c0_29, %c0_30, %c0_31] : memref<4x8x32xf32, #tpu.memory_space<vmem>>, vector<1x8x32xf32>
    %49 = vector.shape_cast %48 : vector<1x8x32xf32> to vector<8x32xf32>
    %50 = vector.broadcast %34 : vector<8x1xf32> to vector<8x32xf32>
    %51 = arith.mulf %50, %49 : vector<8x32xf32>
    %52 = arith.truncf %37 : vector<8x8xf32> to vector<8x8xbf16>
    %cst_32 = arith.constant dense<0.000000e+00> : vector<8x32xf32>
    %53 = tpu.matmul %52, %47, %cst_32 {dimension_numbers = #tpu.dot_dimension_numbers<[1], [0], [0], [1], [0, 0, 1, 1], [], []>} : vector<8x8xbf16>, vector<8x32xbf16>, vector<8x32xf32> -> vector<8x32xf32>
    %54 = arith.addf %51, %53 : vector<8x32xf32>
    %c0_33 = arith.constant 0 : index
    %c0_34 = arith.constant 0 : index
    %c0_35 = arith.constant 0 : index
    %55 = vector.load %arg11[%c0_33, %c0_34, %c0_35] : memref<4x8x32xf32, #tpu.memory_space<vmem>>, vector<1x8x32xf32>
    %56 = vector.shape_cast %55 : vector<1x8x32xf32> to vector<8x32xf32>
    %57 = vector.shape_cast %54 : vector<8x32xf32> to vector<1x8x32xf32>
    tpu.vector_store %arg11[%c0_33, %c0_34, %c0_35], %57 {strides = array<i32>} : memref<4x8x32xf32, #tpu.memory_space<vmem>>, vector<1x8x32xf32>,
    %c0_36 = arith.constant 0 : index
    %c0_37 = arith.constant 0 : index
    %c0_38 = arith.constant 0 : index
    %58 = vector.load %arg9[%c0_36, %c0_37, %c0_38] : memref<4x8x1xf32, #tpu.memory_space<vmem>>, vector<1x8x1xf32>
    %59 = vector.shape_cast %58 : vector<1x8x1xf32> to vector<8x1xf32>
    %60 = vector.shape_cast %32 : vector<8x1xf32> to vector<1x8x1xf32>
    tpu.vector_store %arg9[%c0_36, %c0_37, %c0_38], %60 {strides = array<i32>} : memref<4x8x1xf32, #tpu.memory_space<vmem>>, vector<1x8x1xf32>,
    %61 = vector.extract_strided_slice %9 {offsets = [0, 1], sizes = [8, 1], strides = [1, 1]} : vector<8x4xf32> to vector<8x1xf32>
    %62 = vector.extract_strided_slice %11 {offsets = [1, 0], sizes = [1, 8], strides = [1, 1]} : vector<4x8xf32> to vector<1x8xf32>
    %63 = vector.broadcast %61 : vector<8x1xf32> to vector<8x8xf32>
    %64 = vector.broadcast %62 : vector<1x8xf32> to vector<8x8xf32>
    %65 = arith.addf %63, %64 : vector<8x8xf32>
    %cst_39 = arith.constant 0.000000e+00 : f32
    %66 = vector.broadcast %cst_39 : f32 to vector<8x8xf32>
    %67 = arith.cmpf ogt, %65, %66 : vector<8x8xf32>
    %cst_40 = arith.constant 2.000000e-01 : f32
    %68 = vector.broadcast %cst_40 : f32 to vector<8x8xf32>
    %69 = arith.mulf %68, %65 : vector<8x8xf32>
    %70 = arith.select %67, %65, %69 : vector<8x8xi1>, vector<8x8xf32>
    %cst_41 = arith.constant -9.000000e+15 : f32
    %71 = vector.broadcast %cst_41 : f32 to vector<8x8xf32>
    %72 = arith.select %7, %70, %71 : vector<8x8xi1>, vector<8x8xf32>
    %c1 = arith.constant 1 : index
    %c0_42 = arith.constant 0 : index
    %c0_43 = arith.constant 0 : index
    %73 = vector.load %arg9[%c1, %c0_42, %c0_43] : memref<4x8x1xf32, #tpu.memory_space<vmem>>, vector<1x8x1xf32>
    %74 = vector.shape_cast %73 : vector<1x8x1xf32> to vector<8x1xf32>
    %cst_44 = arith.constant dense<0xFF800000> : vector<8xf32>
    %75 = vector.multi_reduction <maximumf>, %72, %cst_44 [1] : vector<8x8xf32> to vector<8xf32>
    %76 = vector.shape_cast %75 : vector<8xf32> to vector<8x1xf32>
    %77 = arith.maximumf %74, %76 : vector<8x1xf32>
    %78 = arith.subf %74, %77 : vector<8x1xf32>
    %79 = math.exp %78 : vector<8x1xf32>
    %80 = vector.broadcast %77 : vector<8x1xf32> to vector<8x8xf32>
    %81 = arith.subf %72, %80 : vector<8x8xf32>
    %82 = math.exp %81 : vector<8x8xf32>
    %c1_45 = arith.constant 1 : index
    %c0_46 = arith.constant 0 : index
    %c0_47 = arith.constant 0 : index
    %83 = vector.load %arg10[%c1_45, %c0_46, %c0_47] : memref<4x8x1xf32, #tpu.memory_space<vmem>>, vector<1x8x1xf32>
    %84 = vector.shape_cast %83 : vector<1x8x1xf32> to vector<8x1xf32>
    %85 = arith.mulf %79, %84 : vector<8x1xf32>
    %cst_48 = arith.constant dense<0.000000e+00> : vector<8xf32>
    %86 = vector.multi_reduction <add>, %82, %cst_48 [1] : vector<8x8xf32> to vector<8xf32>
    %87 = vector.shape_cast %86 : vector<8xf32> to vector<8x1xf32>
    %88 = arith.addf %85, %87 : vector<8x1xf32>
    %c1_49 = arith.constant 1 : index
    %c0_50 = arith.constant 0 : index
    %c0_51 = arith.constant 0 : index
    %89 = vector.load %arg10[%c1_49, %c0_50, %c0_51] : memref<4x8x1xf32, #tpu.memory_space<vmem>>, vector<1x8x1xf32>
    %90 = vector.shape_cast %89 : vector<1x8x1xf32> to vector<8x1xf32>
    %91 = vector.shape_cast %88 : vector<8x1xf32> to vector<1x8x1xf32>
    tpu.vector_store %arg10[%c1_49, %c0_50, %c0_51], %91 {strides = array<i32>} : memref<4x8x1xf32, #tpu.memory_space<vmem>>, vector<1x8x1xf32>,
    %92 = vector.extract_strided_slice %15 {offsets = [0, 32], sizes = [8, 32], strides = [1, 1]} : vector<8x128xbf16> to vector<8x32xbf16>
    %c1_52 = arith.constant 1 : index
    %c0_53 = arith.constant 0 : index
    %c0_54 = arith.constant 0 : index
    %93 = vector.load %arg11[%c1_52, %c0_53, %c0_54] : memref<4x8x32xf32, #tpu.memory_space<vmem>>, vector<1x8x32xf32>
    %94 = vector.shape_cast %93 : vector<1x8x32xf32> to vector<8x32xf32>
    %95 = vector.broadcast %79 : vector<8x1xf32> to vector<8x32xf32>
    %96 = arith.mulf %95, %94 : vector<8x32xf32>
    %97 = arith.truncf %82 : vector<8x8xf32> to vector<8x8xbf16>
    %cst_55 = arith.constant dense<0.000000e+00> : vector<8x32xf32>
    %98 = tpu.matmul %97, %92, %cst_55 {dimension_numbers = #tpu.dot_dimension_numbers<[1], [0], [0], [1], [0, 0, 1, 1], [], []>} : vector<8x8xbf16>, vector<8x32xbf16>, vector<8x32xf32> -> vector<8x32xf32>
    %99 = arith.addf %96, %98 : vector<8x32xf32>
    %c1_56 = arith.constant 1 : index
    %c0_57 = arith.constant 0 : index
    %c0_58 = arith.constant 0 : index
    %100 = vector.load %arg11[%c1_56, %c0_57, %c0_58] : memref<4x8x32xf32, #tpu.memory_space<vmem>>, vector<1x8x32xf32>
    %101 = vector.shape_cast %100 : vector<1x8x32xf32> to vector<8x32xf32>
    %102 = vector.shape_cast %99 : vector<8x32xf32> to vector<1x8x32xf32>
    tpu.vector_store %arg11[%c1_56, %c0_57, %c0_58], %102 {strides = array<i32>} : memref<4x8x32xf32, #tpu.memory_space<vmem>>, vector<1x8x32xf32>,
    %c1_59 = arith.constant 1 : index
    %c0_60 = arith.constant 0 : index
    %c0_61 = arith.constant 0 : index
    %103 = vector.load %arg9[%c1_59, %c0_60, %c0_61] : memref<4x8x1xf32, #tpu.memory_space<vmem>>, vector<1x8x1xf32>
    %104 = vector.shape_cast %103 : vector<1x8x1xf32> to vector<8x1xf32>
    %105 = vector.shape_cast %77 : vector<8x1xf32> to vector<1x8x1xf32>
    tpu.vector_store %arg9[%c1_59, %c0_60, %c0_61], %105 {strides = array<i32>} : memref<4x8x1xf32, #tpu.memory_space<vmem>>, vector<1x8x1xf32>,
    %106 = vector.extract_strided_slice %9 {offsets = [0, 2], sizes = [8, 1], strides = [1, 1]} : vector<8x4xf32> to vector<8x1xf32>
    %107 = vector.extract_strided_slice %11 {offsets = [2, 0], sizes = [1, 8], strides = [1, 1]} : vector<4x8xf32> to vector<1x8xf32>
    %108 = vector.broadcast %106 : vector<8x1xf32> to vector<8x8xf32>
    %109 = vector.broadcast %107 : vector<1x8xf32> to vector<8x8xf32>
    %110 = arith.addf %108, %109 : vector<8x8xf32>
    %cst_62 = arith.constant 0.000000e+00 : f32
    %111 = vector.broadcast %cst_62 : f32 to vector<8x8xf32>
    %112 = arith.cmpf ogt, %110, %111 : vector<8x8xf32>
    %cst_63 = arith.constant 2.000000e-01 : f32
    %113 = vector.broadcast %cst_63 : f32 to vector<8x8xf32>
    %114 = arith.mulf %113, %110 : vector<8x8xf32>
    %115 = arith.select %112, %110, %114 : vector<8x8xi1>, vector<8x8xf32>
    %cst_64 = arith.constant -9.000000e+15 : f32
    %116 = vector.broadcast %cst_64 : f32 to vector<8x8xf32>
    %117 = arith.select %7, %115, %116 : vector<8x8xi1>, vector<8x8xf32>
    %c2 = arith.constant 2 : index
    %c0_65 = arith.constant 0 : index
    %c0_66 = arith.constant 0 : index
    %118 = vector.load %arg9[%c2, %c0_65, %c0_66] : memref<4x8x1xf32, #tpu.memory_space<vmem>>, vector<1x8x1xf32>
    %119 = vector.shape_cast %118 : vector<1x8x1xf32> to vector<8x1xf32>
    %cst_67 = arith.constant dense<0xFF800000> : vector<8xf32>
    %120 = vector.multi_reduction <maximumf>, %117, %cst_67 [1] : vector<8x8xf32> to vector<8xf32>
    %121 = vector.shape_cast %120 : vector<8xf32> to vector<8x1xf32>
    %122 = arith.maximumf %119, %121 : vector<8x1xf32>
    %123 = arith.subf %119, %122 : vector<8x1xf32>
    %124 = math.exp %123 : vector<8x1xf32>
    %125 = vector.broadcast %122 : vector<8x1xf32> to vector<8x8xf32>
    %126 = arith.subf %117, %125 : vector<8x8xf32>
    %127 = math.exp %126 : vector<8x8xf32>
    %c2_68 = arith.constant 2 : index
    %c0_69 = arith.constant 0 : index
    %c0_70 = arith.constant 0 : index
    %128 = vector.load %arg10[%c2_68, %c0_69, %c0_70] : memref<4x8x1xf32, #tpu.memory_space<vmem>>, vector<1x8x1xf32>
    %129 = vector.shape_cast %128 : vector<1x8x1xf32> to vector<8x1xf32>
    %130 = arith.mulf %124, %129 : vector<8x1xf32>
    %cst_71 = arith.constant dense<0.000000e+00> : vector<8xf32>
    %131 = vector.multi_reduction <add>, %127, %cst_71 [1] : vector<8x8xf32> to vector<8xf32>
    %132 = vector.shape_cast %131 : vector<8xf32> to vector<8x1xf32>
    %133 = arith.addf %130, %132 : vector<8x1xf32>
    %c2_72 = arith.constant 2 : index
    %c0_73 = arith.constant 0 : index
    %c0_74 = arith.constant 0 : index
    %134 = vector.load %arg10[%c2_72, %c0_73, %c0_74] : memref<4x8x1xf32, #tpu.memory_space<vmem>>, vector<1x8x1xf32>
    %135 = vector.shape_cast %134 : vector<1x8x1xf32> to vector<8x1xf32>
    %136 = vector.shape_cast %133 : vector<8x1xf32> to vector<1x8x1xf32>
    tpu.vector_store %arg10[%c2_72, %c0_73, %c0_74], %136 {strides = array<i32>} : memref<4x8x1xf32, #tpu.memory_space<vmem>>, vector<1x8x1xf32>,
    %137 = vector.extract_strided_slice %15 {offsets = [0, 64], sizes = [8, 32], strides = [1, 1]} : vector<8x128xbf16> to vector<8x32xbf16>
    %c2_75 = arith.constant 2 : index
    %c0_76 = arith.constant 0 : index
    %c0_77 = arith.constant 0 : index
    %138 = vector.load %arg11[%c2_75, %c0_76, %c0_77] : memref<4x8x32xf32, #tpu.memory_space<vmem>>, vector<1x8x32xf32>
    %139 = vector.shape_cast %138 : vector<1x8x32xf32> to vector<8x32xf32>
    %140 = vector.broadcast %124 : vector<8x1xf32> to vector<8x32xf32>
    %141 = arith.mulf %140, %139 : vector<8x32xf32>
    %142 = arith.truncf %127 : vector<8x8xf32> to vector<8x8xbf16>
    %cst_78 = arith.constant dense<0.000000e+00> : vector<8x32xf32>
    %143 = tpu.matmul %142, %137, %cst_78 {dimension_numbers = #tpu.dot_dimension_numbers<[1], [0], [0], [1], [0, 0, 1, 1], [], []>} : vector<8x8xbf16>, vector<8x32xbf16>, vector<8x32xf32> -> vector<8x32xf32>
    %144 = arith.addf %141, %143 : vector<8x32xf32>
    %c2_79 = arith.constant 2 : index
    %c0_80 = arith.constant 0 : index
    %c0_81 = arith.constant 0 : index
    %145 = vector.load %arg11[%c2_79, %c0_80, %c0_81] : memref<4x8x32xf32, #tpu.memory_space<vmem>>, vector<1x8x32xf32>
    %146 = vector.shape_cast %145 : vector<1x8x32xf32> to vector<8x32xf32>
    %147 = vector.shape_cast %144 : vector<8x32xf32> to vector<1x8x32xf32>
    tpu.vector_store %arg11[%c2_79, %c0_80, %c0_81], %147 {strides = array<i32>} : memref<4x8x32xf32, #tpu.memory_space<vmem>>, vector<1x8x32xf32>,
    %c2_82 = arith.constant 2 : index
    %c0_83 = arith.constant 0 : index
    %c0_84 = arith.constant 0 : index
    %148 = vector.load %arg9[%c2_82, %c0_83, %c0_84] : memref<4x8x1xf32, #tpu.memory_space<vmem>>, vector<1x8x1xf32>
    %149 = vector.shape_cast %148 : vector<1x8x1xf32> to vector<8x1xf32>
    %150 = vector.shape_cast %122 : vector<8x1xf32> to vector<1x8x1xf32>
    tpu.vector_store %arg9[%c2_82, %c0_83, %c0_84], %150 {strides = array<i32>} : memref<4x8x1xf32, #tpu.memory_space<vmem>>, vector<1x8x1xf32>,
    %151 = vector.extract_strided_slice %9 {offsets = [0, 3], sizes = [8, 1], strides = [1, 1]} : vector<8x4xf32> to vector<8x1xf32>
    %152 = vector.extract_strided_slice %11 {offsets = [3, 0], sizes = [1, 8], strides = [1, 1]} : vector<4x8xf32> to vector<1x8xf32>
    %153 = vector.broadcast %151 : vector<8x1xf32> to vector<8x8xf32>
    %154 = vector.broadcast %152 : vector<1x8xf32> to vector<8x8xf32>
    %155 = arith.addf %153, %154 : vector<8x8xf32>
    %cst_85 = arith.constant 0.000000e+00 : f32
    %156 = vector.broadcast %cst_85 : f32 to vector<8x8xf32>
    %157 = arith.cmpf ogt, %155, %156 : vector<8x8xf32>
    %cst_86 = arith.constant 2.000000e-01 : f32
    %158 = vector.broadcast %cst_86 : f32 to vector<8x8xf32>
    %159 = arith.mulf %158, %155 : vector<8x8xf32>
    %160 = arith.select %157, %155, %159 : vector<8x8xi1>, vector<8x8xf32>
    %cst_87 = arith.constant -9.000000e+15 : f32
    %161 = vector.broadcast %cst_87 : f32 to vector<8x8xf32>
    %162 = arith.select %7, %160, %161 : vector<8x8xi1>, vector<8x8xf32>
    %c3 = arith.constant 3 : index
    %c0_88 = arith.constant 0 : index
    %c0_89 = arith.constant 0 : index
    %163 = vector.load %arg9[%c3, %c0_88, %c0_89] : memref<4x8x1xf32, #tpu.memory_space<vmem>>, vector<1x8x1xf32>
    %164 = vector.shape_cast %163 : vector<1x8x1xf32> to vector<8x1xf32>
    %cst_90 = arith.constant dense<0xFF800000> : vector<8xf32>
    %165 = vector.multi_reduction <maximumf>, %162, %cst_90 [1] : vector<8x8xf32> to vector<8xf32>
    %166 = vector.shape_cast %165 : vector<8xf32> to vector<8x1xf32>
    %167 = arith.maximumf %164, %166 : vector<8x1xf32>
    %168 = arith.subf %164, %167 : vector<8x1xf32>
    %169 = math.exp %168 : vector<8x1xf32>
    %170 = vector.broadcast %167 : vector<8x1xf32> to vector<8x8xf32>
    %171 = arith.subf %162, %170 : vector<8x8xf32>
    %172 = math.exp %171 : vector<8x8xf32>
    %c3_91 = arith.constant 3 : index
    %c0_92 = arith.constant 0 : index
    %c0_93 = arith.constant 0 : index
    %173 = vector.load %arg10[%c3_91, %c0_92, %c0_93] : memref<4x8x1xf32, #tpu.memory_space<vmem>>, vector<1x8x1xf32>
    %174 = vector.shape_cast %173 : vector<1x8x1xf32> to vector<8x1xf32>
    %175 = arith.mulf %169, %174 : vector<8x1xf32>
    %cst_94 = arith.constant dense<0.000000e+00> : vector<8xf32>
    %176 = vector.multi_reduction <add>, %172, %cst_94 [1] : vector<8x8xf32> to vector<8xf32>
    %177 = vector.shape_cast %176 : vector<8xf32> to vector<8x1xf32>
    %178 = arith.addf %175, %177 : vector<8x1xf32>
    %c3_95 = arith.constant 3 : index
    %c0_96 = arith.constant 0 : index
    %c0_97 = arith.constant 0 : index
    %179 = vector.load %arg10[%c3_95, %c0_96, %c0_97] : memref<4x8x1xf32, #tpu.memory_space<vmem>>, vector<1x8x1xf32>
    %180 = vector.shape_cast %179 : vector<1x8x1xf32> to vector<8x1xf32>
    %181 = vector.shape_cast %178 : vector<8x1xf32> to vector<1x8x1xf32>
    tpu.vector_store %arg10[%c3_95, %c0_96, %c0_97], %181 {strides = array<i32>} : memref<4x8x1xf32, #tpu.memory_space<vmem>>, vector<1x8x1xf32>,
    %182 = vector.extract_strided_slice %15 {offsets = [0, 96], sizes = [8, 32], strides = [1, 1]} : vector<8x128xbf16> to vector<8x32xbf16>
    %c3_98 = arith.constant 3 : index
    %c0_99 = arith.constant 0 : index
    %c0_100 = arith.constant 0 : index
    %183 = vector.load %arg11[%c3_98, %c0_99, %c0_100] : memref<4x8x32xf32, #tpu.memory_space<vmem>>, vector<1x8x32xf32>
    %184 = vector.shape_cast %183 : vector<1x8x32xf32> to vector<8x32xf32>
    %185 = vector.broadcast %169 : vector<8x1xf32> to vector<8x32xf32>
    %186 = arith.mulf %185, %184 : vector<8x32xf32>
    %187 = arith.truncf %172 : vector<8x8xf32> to vector<8x8xbf16>
    %cst_101 = arith.constant dense<0.000000e+00> : vector<8x32xf32>
    %188 = tpu.matmul %187, %182, %cst_101 {dimension_numbers = #tpu.dot_dimension_numbers<[1], [0], [0], [1], [0, 0, 1, 1], [], []>} : vector<8x8xbf16>, vector<8x32xbf16>, vector<8x32xf32> -> vector<8x32xf32>
    %189 = arith.addf %186, %188 : vector<8x32xf32>
    %c3_102 = arith.constant 3 : index
    %c0_103 = arith.constant 0 : index
    %c0_104 = arith.constant 0 : index
    %190 = vector.load %arg11[%c3_102, %c0_103, %c0_104] : memref<4x8x32xf32, #tpu.memory_space<vmem>>, vector<1x8x32xf32>
    %191 = vector.shape_cast %190 : vector<1x8x32xf32> to vector<8x32xf32>
    %192 = vector.shape_cast %189 : vector<8x32xf32> to vector<1x8x32xf32>
    tpu.vector_store %arg11[%c3_102, %c0_103, %c0_104], %192 {strides = array<i32>} : memref<4x8x32xf32, #tpu.memory_space<vmem>>, vector<1x8x32xf32>,
    %c3_105 = arith.constant 3 : index
    %c0_106 = arith.constant 0 : index
    %c0_107 = arith.constant 0 : index
    %193 = vector.load %arg9[%c3_105, %c0_106, %c0_107] : memref<4x8x1xf32, #tpu.memory_space<vmem>>, vector<1x8x1xf32>
    %194 = vector.shape_cast %193 : vector<1x8x1xf32> to vector<8x1xf32>
    %195 = vector.shape_cast %167 : vector<8x1xf32> to vector<1x8x1xf32>
    tpu.vector_store %arg9[%c3_105, %c0_106, %c0_107], %195 {strides = array<i32>} : memref<4x8x1xf32, #tpu.memory_space<vmem>>, vector<1x8x1xf32>,
    %c0_i32_108 = arith.constant 0 : i32
    %196 = arith.cmpi eq, %arg1, %c0_i32_108 : i32
    %197 = arith.extui %196 : i1 to i32
    %c0_i32_109 = arith.constant 0 : i32
    %198 = arith.cmpi ne, %197, %c0_i32_109 : i32
    scf.if %198 {
      %c0_110 = arith.constant 0 : index
      %c0_111 = arith.constant 0 : index
      %c0_112 = arith.constant 0 : index
      %199 = vector.load %arg10[%c0_110, %c0_111, %c0_112] : memref<4x8x1xf32, #tpu.memory_space<vmem>>, vector<1x8x1xf32>
      %200 = vector.shape_cast %199 : vector<1x8x1xf32> to vector<8x1xf32>
      %201 = tpu.reciprocal %200 {approx = true} : vector<8x1xf32> -> vector<8x1xf32>
      %c0_113 = arith.constant 0 : index
      %c0_114 = arith.constant 0 : index
      %c0_115 = arith.constant 0 : index
      %202 = vector.load %arg11[%c0_113, %c0_114, %c0_115] : memref<4x8x32xf32, #tpu.memory_space<vmem>>, vector<1x8x32xf32>
      %203 = vector.shape_cast %202 : vector<1x8x32xf32> to vector<8x32xf32>
      %204 = vector.broadcast %201 : vector<8x1xf32> to vector<8x32xf32>
      %205 = arith.mulf %203, %204 : vector<8x32xf32>
      %cst_116 = arith.constant 0.000000e+00 : f32
      %206 = vector.broadcast %cst_116 : f32 to vector<8x32xf32>
      %207 = arith.cmpf ogt, %205, %206 : vector<8x32xf32>
      %cst_117 = arith.constant 0.000000e+00 : f32
      %208 = vector.broadcast %cst_117 : f32 to vector<8x32xf32>
      %209 = arith.minimumf %205, %208 : vector<8x32xf32>
      %210 = math.exp %209 : vector<8x32xf32>
      %cst_118 = arith.constant 1.000000e+00 : f32
      %211 = vector.broadcast %cst_118 : f32 to vector<8x32xf32>
      %212 = arith.subf %210, %211 : vector<8x32xf32>
      %213 = arith.select %207, %205, %212 : vector<8x32xi1>, vector<8x32xf32>
      %c0_119 = arith.constant 0 : index
      %c0_120 = arith.constant 0 : index
      %214 = vector.load %arg8[%c0_119, %c0_120] : memref<8x128xf32, #tpu.memory_space<vmem>>, vector<8x32xf32>
      tpu.vector_store %arg8[%c0_119, %c0_120], %213 {strides = array<i32>} : memref<8x128xf32, #tpu.memory_space<vmem>>, vector<8x32xf32>,
      %c1_121 = arith.constant 1 : index
      %c0_122 = arith.constant 0 : index
      %c0_123 = arith.constant 0 : index
      %215 = vector.load %arg10[%c1_121, %c0_122, %c0_123] : memref<4x8x1xf32, #tpu.memory_space<vmem>>, vector<1x8x1xf32>
      %216 = vector.shape_cast %215 : vector<1x8x1xf32> to vector<8x1xf32>
      %217 = tpu.reciprocal %216 {approx = true} : vector<8x1xf32> -> vector<8x1xf32>
      %c1_124 = arith.constant 1 : index
      %c0_125 = arith.constant 0 : index
      %c0_126 = arith.constant 0 : index
      %218 = vector.load %arg11[%c1_124, %c0_125, %c0_126] : memref<4x8x32xf32, #tpu.memory_space<vmem>>, vector<1x8x32xf32>
      %219 = vector.shape_cast %218 : vector<1x8x32xf32> to vector<8x32xf32>
      %220 = vector.broadcast %217 : vector<8x1xf32> to vector<8x32xf32>
      %221 = arith.mulf %219, %220 : vector<8x32xf32>
      %cst_127 = arith.constant 0.000000e+00 : f32
      %222 = vector.broadcast %cst_127 : f32 to vector<8x32xf32>
      %223 = arith.cmpf ogt, %221, %222 : vector<8x32xf32>
      %cst_128 = arith.constant 0.000000e+00 : f32
      %224 = vector.broadcast %cst_128 : f32 to vector<8x32xf32>
      %225 = arith.minimumf %221, %224 : vector<8x32xf32>
      %226 = math.exp %225 : vector<8x32xf32>
      %cst_129 = arith.constant 1.000000e+00 : f32
      %227 = vector.broadcast %cst_129 : f32 to vector<8x32xf32>
      %228 = arith.subf %226, %227 : vector<8x32xf32>
      %229 = arith.select %223, %221, %228 : vector<8x32xi1>, vector<8x32xf32>
      %c0_130 = arith.constant 0 : index
      %c32 = arith.constant 32 : index
      %230 = vector.load %arg8[%c0_130, %c32] : memref<8x128xf32, #tpu.memory_space<vmem>>, vector<8x32xf32>
      tpu.vector_store %arg8[%c0_130, %c32], %229 {strides = array<i32>} : memref<8x128xf32, #tpu.memory_space<vmem>>, vector<8x32xf32>,
      %c2_131 = arith.constant 2 : index
      %c0_132 = arith.constant 0 : index
      %c0_133 = arith.constant 0 : index
      %231 = vector.load %arg10[%c2_131, %c0_132, %c0_133] : memref<4x8x1xf32, #tpu.memory_space<vmem>>, vector<1x8x1xf32>
      %232 = vector.shape_cast %231 : vector<1x8x1xf32> to vector<8x1xf32>
      %233 = tpu.reciprocal %232 {approx = true} : vector<8x1xf32> -> vector<8x1xf32>
      %c2_134 = arith.constant 2 : index
      %c0_135 = arith.constant 0 : index
      %c0_136 = arith.constant 0 : index
      %234 = vector.load %arg11[%c2_134, %c0_135, %c0_136] : memref<4x8x32xf32, #tpu.memory_space<vmem>>, vector<1x8x32xf32>
      %235 = vector.shape_cast %234 : vector<1x8x32xf32> to vector<8x32xf32>
      %236 = vector.broadcast %233 : vector<8x1xf32> to vector<8x32xf32>
      %237 = arith.mulf %235, %236 : vector<8x32xf32>
      %cst_137 = arith.constant 0.000000e+00 : f32
      %238 = vector.broadcast %cst_137 : f32 to vector<8x32xf32>
      %239 = arith.cmpf ogt, %237, %238 : vector<8x32xf32>
      %cst_138 = arith.constant 0.000000e+00 : f32
      %240 = vector.broadcast %cst_138 : f32 to vector<8x32xf32>
      %241 = arith.minimumf %237, %240 : vector<8x32xf32>
      %242 = math.exp %241 : vector<8x32xf32>
      %cst_139 = arith.constant 1.000000e+00 : f32
      %243 = vector.broadcast %cst_139 : f32 to vector<8x32xf32>
      %244 = arith.subf %242, %243 : vector<8x32xf32>
      %245 = arith.select %239, %237, %244 : vector<8x32xi1>, vector<8x32xf32>
      %c0_140 = arith.constant 0 : index
      %c64 = arith.constant 64 : index
      %246 = vector.load %arg8[%c0_140, %c64] : memref<8x128xf32, #tpu.memory_space<vmem>>, vector<8x32xf32>
      tpu.vector_store %arg8[%c0_140, %c64], %245 {strides = array<i32>} : memref<8x128xf32, #tpu.memory_space<vmem>>, vector<8x32xf32>,
      %c3_141 = arith.constant 3 : index
      %c0_142 = arith.constant 0 : index
      %c0_143 = arith.constant 0 : index
      %247 = vector.load %arg10[%c3_141, %c0_142, %c0_143] : memref<4x8x1xf32, #tpu.memory_space<vmem>>, vector<1x8x1xf32>
      %248 = vector.shape_cast %247 : vector<1x8x1xf32> to vector<8x1xf32>
      %249 = tpu.reciprocal %248 {approx = true} : vector<8x1xf32> -> vector<8x1xf32>
      %c3_144 = arith.constant 3 : index
      %c0_145 = arith.constant 0 : index
      %c0_146 = arith.constant 0 : index
      %250 = vector.load %arg11[%c3_144, %c0_145, %c0_146] : memref<4x8x32xf32, #tpu.memory_space<vmem>>, vector<1x8x32xf32>
      %251 = vector.shape_cast %250 : vector<1x8x32xf32> to vector<8x32xf32>
      %252 = vector.broadcast %249 : vector<8x1xf32> to vector<8x32xf32>
      %253 = arith.mulf %251, %252 : vector<8x32xf32>
      %cst_147 = arith.constant 0.000000e+00 : f32
      %254 = vector.broadcast %cst_147 : f32 to vector<8x32xf32>
      %255 = arith.cmpf ogt, %253, %254 : vector<8x32xf32>
      %cst_148 = arith.constant 0.000000e+00 : f32
      %256 = vector.broadcast %cst_148 : f32 to vector<8x32xf32>
      %257 = arith.minimumf %253, %256 : vector<8x32xf32>
      %258 = math.exp %257 : vector<8x32xf32>
      %cst_149 = arith.constant 1.000000e+00 : f32
      %259 = vector.broadcast %cst_149 : f32 to vector<8x32xf32>
      %260 = arith.subf %258, %259 : vector<8x32xf32>
      %261 = arith.select %255, %253, %260 : vector<8x32xi1>, vector<8x32xf32>
      %c0_150 = arith.constant 0 : index
      %c96 = arith.constant 96 : index
      %262 = vector.load %arg8[%c0_150, %c96] : memref<8x128xf32, #tpu.memory_space<vmem>>, vector<8x32xf32>
      tpu.vector_store %arg8[%c0_150, %c96], %261 {strides = array<i32>} : memref<8x128xf32, #tpu.memory_space<vmem>>, vector<8x32xf32>,
    } else {
    }
    return
  }
  func.func @transform_0(%arg0: i32, %arg1: i32) -> (i32, i32) {
    %c0_i32 = arith.constant 0 : i32
    %c0_i32_0 = arith.constant 0 : i32
    return %arg0, %c0_i32 : i32, i32
  }
  func.func @transform_1(%arg0: i32, %arg1: i32) -> (i32, i32) {
    %c0_i32 = arith.constant 0 : i32
    %c0_i32_0 = arith.constant 0 : i32
    return %arg1, %c0_i32 : i32, i32
  }
  func.func @transform_2(%arg0: i32, %arg1: i32) -> (i32, i32) {
    %c0_i32 = arith.constant 0 : i32
    return %arg0, %arg1 : i32, i32
  }
  func.func @transform_3(%arg0: i32, %arg1: i32) -> (i32, i32) {
    %c0_i32 = arith.constant 0 : i32
    %c0_i32_0 = arith.constant 0 : i32
    %c0_i32_1 = arith.constant 0 : i32
    return %c0_i32, %c0_i32_0 : i32, i32
  }
  func.func @transform_4(%arg0: i32, %arg1: i32) -> (i32, i32) {
    %c0_i32 = arith.constant 0 : i32
    %c0_i32_0 = arith.constant 0 : i32
    %c0_i32_1 = arith.constant 0 : i32
    return %c0_i32, %c0_i32_0 : i32, i32
  }
  func.func @transform_5(%arg0: i32, %arg1: i32) -> (i32, i32) {
    %c0_i32 = arith.constant 0 : i32
    %c0_i32_0 = arith.constant 0 : i32
    %c0_i32_1 = arith.constant 0 : i32
    return %c0_i32, %c0_i32_0 : i32, i32
  }
  func.func @transform_6(%arg0: i32, %arg1: i32) -> (i32, i32) {
    %c0_i32 = arith.constant 0 : i32
    %c0_i32_0 = arith.constant 0 : i32
    return %arg0, %c0_i32 : i32, i32
  }
}

</mosaic_0001>

<llo_original>
// kernel: tpu_custom_call.1
$region0: #{tpu_custom_call.1}
  #allocation0 [shape = 'u32[]', space=smem, size = 0x4, offset = 0x4, fixed_abs, tag = 'smem constant byte address 0x4 - core index']
  #allocation1 [shape = 'u32[144,128]{1,0:T(1,128)}', space=vmem, size = 0x12000, scoped, tag = 'internal scratch']
  #allocation2 [shape = 'f32[4,8,1]{2,1,0:T(8,128)}', space=vmem, size = 0x4000, scoped, tag = 'scratch operand']
  #allocation3 [shape = 'f32[4,8,1]{2,1,0:T(8,128)}', space=vmem, size = 0x4000, scoped, tag = 'scratch operand']
  #allocation4 [shape = 'f32[4,8,32]{2,1,0:T(8,128)}', space=vmem, size = 0x4000, scoped, tag = 'scratch operand']
  %s0 = inlined_call_operand.vmem [shape: f32[8,16], index: 0, kind: input, shape index: {}]
  %s1 = inlined_call_operand.vmem [shape: f32[8,16], index: 1, kind: input, shape index: {}]
  %s2 = inlined_call_operand.vmem [shape: f32[8,8], index: 2, kind: input, shape index: {}]
  %s3 = inlined_call_operand.hbm [shape: bf16[16,128], index: 3, kind: input, shape index: {}]
  %s4 = inlined_call_operand.vmem [shape: f32[16,4], index: 4, kind: input, shape index: {}]
  %s5 = inlined_call_operand.vmem [shape: f32[4,16], index: 5, kind: input, shape index: {}]
  %s6 = inlined_call_operand.hbm [shape: f32[8,128], index: 6, kind: output, shape index: {}]
  %s7 = sld [smem:[#allocation0]]
  $region46: #{tpu_custom_call.1} parent=0
    _
  %s9 = ssub.s32 1, %s7
  %s10 = scalar_select 0, %s9, %s7
  $region1: #{tpu_custom_call.1} parent=0
    #allocation5 [shape = 'u8[4096]{0}', space=vmem, size = 0x1000, scoped, tag = 'input window, operand 3, single buffered']
    #allocation6 [shape = 's32[1]{0}', space=sflag, size = 0x4, scoped, tag = 'scoped memory for tpu_custom_call.1']
    #allocation7 [shape = 's32[1]{0}', space=sflag, size = 0x4, scoped, tag = 'scoped memory for tpu_custom_call.1']
    #allocation8 [shape = 'u8[4096]{0}', space=vmem, size = 0x1000, scoped, tag = 'output window, operand 0, single buffered']
    %11 = vsyncpa [#allocation6], 0
    %12 = vsyncpa [#allocation7], 0
    // Predicated region
    $region2: #{tpu_custom_call.1} parent=1 // pred_check
      _
    $region3: #{tpu_custom_call.1} parent=1 // pred_check_branch
      %14 = sbr.rel (0) target = $region5
    $region4: #{tpu_custom_call.1} parent=1 // pred_region
      _
    $region5: #{tpu_custom_call.1} parent=1 // pred_fallthru
      _
    // Predicated region
    $region6: #{tpu_custom_call.1} parent=1 // pred_check
      _
    $region7: #{tpu_custom_call.1} parent=1 // pred_check_branch
      %16 = sbr.rel (0) target = $region9
    $region8: #{tpu_custom_call.1} parent=1 // pred_region
      _
    $region9: #{tpu_custom_call.1} parent=1 // pred_fallthru
      _
    // Predicated region
    $region10: #{tpu_custom_call.1} parent=1 // pred_check
      _
    $region11: #{tpu_custom_call.1} parent=1 // pred_check_branch
      %18 = sbr.rel (0) target = $region13
    $region12: #{tpu_custom_call.1} parent=1 // pred_region
      _
    $region13: #{tpu_custom_call.1} parent=1 // pred_fallthru
      _
    // Predicated region
    $region14: #{tpu_custom_call.1} parent=1 // pred_check
      _
    $region15: #{tpu_custom_call.1} parent=1 // pred_check_branch
      %20 = sbr.rel (0) target = $region17
    $region16: #{tpu_custom_call.1} parent=1 // pred_region
      %s22 = ssub.s32 128, 128
      %23 = vsyncadd [#allocation6], %s22
      %s24 = sshll.u32 [#allocation5], 4
      %s25 = int_to_ptr.vmem [resolvable:$true] %s24
      %30 = dma.hbm_to_vmem [thread:$0]  %s3, 128, %s25, [#allocation6], 64, 64, 4
    $region17: #{tpu_custom_call.1} parent=1 // pred_fallthru
      _
    // Predicated region
    $region18: #{tpu_custom_call.1} parent=1 // pred_check
      _
    $region19: #{tpu_custom_call.1} parent=1 // pred_check_branch
      %32 = sbr.rel (0) target = $region21
    $region20: #{tpu_custom_call.1} parent=1 // pred_region
      _
    $region21: #{tpu_custom_call.1} parent=1 // pred_fallthru
      _
    // Predicated region
    $region22: #{tpu_custom_call.1} parent=1 // pred_check
      _
    $region23: #{tpu_custom_call.1} parent=1 // pred_check_branch
      %34 = sbr.rel (0) target = $region25
    $region24: #{tpu_custom_call.1} parent=1 // pred_region
      _
    $region25: #{tpu_custom_call.1} parent=1 // pred_fallthru
      _
    // Predicated region
    $region26: #{tpu_custom_call.1} parent=1 // pred_check
      _
    $region27: #{tpu_custom_call.1} parent=1 // pred_check_branch
      %36 = sbr.rel (0) target = $region29
    $region28: #{tpu_custom_call.1} parent=1 // pred_region
      %37 = dma.done [#allocation6], 128
    $region29: #{tpu_custom_call.1} parent=1 // pred_fallthru
      _
    %p39 = scmp.eq.s32.totalorder 0, 0
    // Predicated region
    $region30: #{tpu_custom_call.1} parent=1 // pred_check
      %p40 = pneg %p39
    $region31: #{tpu_custom_call.1} parent=1 // pred_check_branch
      %42 = sbr.rel (%p40) target = $region33
    $region32: #{tpu_custom_call.1} parent=1 // pred_region
      %vm43 = vcmask 7168
      %44 = vst.msk [vmem:[#allocation2] sm:$0xff] %vm43, -inf
      %45 = vst.msk [vmem:[#allocation2 + $0x8] sm:$0xff] %vm43, -inf
      %46 = vst.msk [vmem:[#allocation2 + $0x10] sm:$0xff] %vm43, -inf
      %47 = vst.msk [vmem:[#allocation2 + $0x18] sm:$0xff] %vm43, -inf
      %48 = vst.msk [vmem:[#allocation3] sm:$0xff] %vm43, 0.0
      %49 = vst.msk [vmem:[#allocation3 + $0x8] sm:$0xff] %vm43, 0.0
      %50 = vst.msk [vmem:[#allocation3 + $0x10] sm:$0xff] %vm43, 0.0
      %51 = vst.msk [vmem:[#allocation3 + $0x18] sm:$0xff] %vm43, 0.0
      %vm52 = vcmask 261120
      %53 = vst.msk [vmem:[#allocation4] sm:$0xff] %vm52, 0.0
      %54 = vst.msk [vmem:[#allocation4 + $0x8] sm:$0xff] %vm52, 0.0
      %55 = vst.msk [vmem:[#allocation4 + $0x10] sm:$0xff] %vm52, 0.0
      %56 = vst.msk [vmem:[#allocation4 + $0x18] sm:$0xff] %vm52, 0.0
    $region33: #{tpu_custom_call.1} parent=1 // pred_fallthru
      _
    %v57 = vld [vmem:[%s0] sm:$0xff]
    %v58 = vld [vmem:[%s1] sm:$0xff]
    %v59 = vld [vmem:[%s2] sm:$0xff]
    %vm60 = vcmp.gt.f32.partialorder %v59, 0.0
    %v61 = vld [vmem:[%s4] sm:$0xff]
    %v62 = vld [vmem:[%s4 + $0x8] sm:$0xff]
    %vm63 = vcmask 130048
    %v65 = vsel %vm63, %v57, 0
    %67 = vmatprep.subr.mxu0 0.0
    %68 = vmatpush1.msra.mxu0 %v61
    %69 = vmatprep.subr.mxu0 0.0
    %70 = vmatpush1.msra.mxu0 %v62
    %71 = vmatprep.subr.mxu0 0.0
    %72 = vmatpush1.msra.mxu0 0.0
    %73 = vmatprep.subr.mxu0 0.0
    %74 = vmatpush1.msra.mxu0 0.0
    %75 = vmatprep.subr.mxu0 0.0
    %76 = vmatpush1.msra.mxu0 0.0
    %77 = vmatprep.subr.mxu0 0.0
    %78 = vmatpush1.msra.mxu0 0.0
    %79 = vmatprep.subr.mxu0 0.0
    %80 = vmatpush1.msra.mxu0 0.0
    %81 = vmatprep.subr.mxu0 0.0
    %82 = vmatpush1.msra.mxu0 0.0
    %83 = vmatprep.subr.mxu0 0.0
    %84 = vmatpush1.msra.mxu0 0.0
    %85 = vmatprep.subr.mxu0 0.0
    %86 = vmatpush1.msra.mxu0 0.0
    %87 = vmatprep.subr.mxu0 0.0
    %88 = vmatpush1.msra.mxu0 0.0
    %89 = vmatprep.subr.mxu0 0.0
    %90 = vmatpush1.msra.mxu0 0.0
    %91 = vmatprep.subr.mxu0 0.0
    %92 = vmatpush1.msra.mxu0 0.0
    %93 = vmatprep.subr.mxu0 0.0
    %94 = vmatpush1.msra.mxu0 0.0
    %95 = vmatprep.subr.mxu0 0.0
    %96 = vmatpush1.msra.mxu0 0.0
    %97 = vmatprep.subr.mxu0 0.0
    %98 = vmatpush1.msra.mxu0 0.0
    %99 = vmatprep.subr.mxu0 0.0
    %100 = vmatpush1.msra.mxu0 0.0
    %101 = vmatprep.subr.mxu0 0.0
    %102 = vmatpush1.msra.mxu0 0.0
    %103 = vmatprep.subr.mxu0 0.0
    %104 = vmatpush1.msra.mxu0 0.0
    %105 = vmatprep.subr.mxu0 0.0
    %106 = vmatpush1.msra.mxu0 0.0
    %107 = vmatprep.subr.mxu0 0.0
    %108 = vmatpush1.msra.mxu0 0.0
    %109 = vmatprep.subr.mxu0 0.0
    %110 = vmatpush1.msra.mxu0 0.0
    %111 = vmatprep.subr.mxu0 0.0
    %112 = vmatpush1.msra.mxu0 0.0
    %113 = vmatprep.subr.mxu0 0.0
    %114 = vmatpush1.msra.mxu0 0.0
    %115 = vmatprep.subr.mxu0 0.0
    %116 = vmatpush1.msra.mxu0 0.0
    %117 = vmatprep.subr.mxu0 0.0
    %118 = vmatpush1.msra.mxu0 0.0
    %119 = vmatprep.subr.mxu0 0.0
    %120 = vmatpush1.msra.mxu0 0.0
    %121 = vmatprep.subr.mxu0 0.0
    %122 = vmatpush1.msra.mxu0 0.0
    %123 = vmatprep.subr.mxu0 0.0
    %124 = vmatpush1.msra.mxu0 0.0
    %125 = vmatprep.subr.mxu0 0.0
    %126 = vmatpush1.msra.mxu0 0.0
    %127 = vmatprep.subr.mxu0 0.0
    %128 = vmatpush1.msra.mxu0 0.0
    %129 = vmatprep.subr.mxu0 0.0
    %130 = vmatpush1.msra.mxu0 0.0
    %131 = vmatprep.mubr.f32.mxu0 0.0
    %132 = vmatmul.mubr.f32.gmra.mrb[0].mxu0 %v65
    %v133 = vpop.f32.mrb[0].mxu0
    %v134 = vadd.f32 0.0, %v133
    %v135 = vpop.f32.mrb[0].mxu0
    %136 = vdwg.mxu0
    %v137 = vld [vmem:[%s5] sm:$0xf]
    %v139 = vsel %vm63, %v137, 0
    %v142 = vsel %vm63, %v58, 0
    %144 = vmatprep.subr.mxu0 0.0
    %145 = vmatpush1.xpose.msra.mxu0 %v142
    %146 = vmatprep.subr.mxu0 0.0
    %147 = vmatpush1.xpose.msra.mxu0 0.0
    %148 = vmatprep.subr.mxu0 0.0
    %149 = vmatpush1.xpose.msra.mxu0 0.0
    %150 = vmatprep.subr.mxu0 0.0
    %151 = vmatpush1.xpose.msra.mxu0 0.0
    %152 = vmatprep.subr.mxu0 0.0
    %153 = vmatpush1.xpose.msra.mxu0 0.0
    %154 = vmatprep.subr.mxu0 0.0
    %155 = vmatpush1.xpose.msra.mxu0 0.0
    %156 = vmatprep.subr.mxu0 0.0
    %157 = vmatpush1.xpose.msra.mxu0 0.0
    %158 = vmatprep.subr.mxu0 0.0
    %159 = vmatpush1.xpose.msra.mxu0 0.0
    %160 = vmatprep.subr.mxu0 0.0
    %161 = vmatpush1.xpose.msra.mxu0 0.0
    %162 = vmatprep.subr.mxu0 0.0
    %163 = vmatpush1.xpose.msra.mxu0 0.0
    %164 = vmatprep.subr.mxu0 0.0
    %165 = vmatpush1.xpose.msra.mxu0 0.0
    %166 = vmatprep.subr.mxu0 0.0
    %167 = vmatpush1.xpose.msra.mxu0 0.0
    %168 = vmatprep.subr.mxu0 0.0
    %169 = vmatpush1.xpose.msra.mxu0 0.0
    %170 = vmatprep.subr.mxu0 0.0
    %171 = vmatpush1.xpose.msra.mxu0 0.0
    %172 = vmatprep.subr.mxu0 0.0
    %173 = vmatpush1.xpose.msra.mxu0 0.0
    %174 = vmatprep.subr.mxu0 0.0
    %175 = vmatpush1.xpose.msra.mxu0 0.0
    %176 = vmatprep.subr.mxu0 0.0
    %177 = vmatpush1.xpose.msra.mxu0 0.0
    %178 = vmatprep.subr.mxu0 0.0
    %179 = vmatpush1.xpose.msra.mxu0 0.0
    %180 = vmatprep.subr.mxu0 0.0
    %181 = vmatpush1.xpose.msra.mxu0 0.0
    %182 = vmatprep.subr.mxu0 0.0
    %183 = vmatpush1.xpose.msra.mxu0 0.0
    %184 = vmatprep.subr.mxu0 0.0
    %185 = vmatpush1.xpose.msra.mxu0 0.0
    %186 = vmatprep.subr.mxu0 0.0
    %187 = vmatpush1.xpose.msra.mxu0 0.0
    %188 = vmatprep.subr.mxu0 0.0
    %189 = vmatpush1.xpose.msra.mxu0 0.0
    %190 = vmatprep.subr.mxu0 0.0
    %191 = vmatpush1.xpose.msra.mxu0 0.0
    %192 = vmatprep.subr.mxu0 0.0
    %193 = vmatpush1.xpose.msra.mxu0 0.0
    %194 = vmatprep.subr.mxu0 0.0
    %195 = vmatpush1.xpose.msra.mxu0 0.0
    %196 = vmatprep.subr.mxu0 0.0
    %197 = vmatpush1.xpose.msra.mxu0 0.0
    %198 = vmatprep.subr.mxu0 0.0
    %199 = vmatpush1.xpose.msra.mxu0 0.0
    %200 = vmatprep.subr.mxu0 0.0
    %201 = vmatpush1.xpose.msra.mxu0 0.0
    %202 = vmatprep.subr.mxu0 0.0
    %203 = vmatpush1.xpose.msra.mxu0 0.0
    %204 = vmatprep.subr.mxu0 0.0
    %205 = vmatpush1.xpose.msra.mxu0 0.0
    %206 = vmatprep.subr.mxu0 0.0
    %207 = vmatpush1.xpose.msra.mxu0 0.0
    %208 = vmatprep.mubr.f32.mxu0 0.0
    %209 = vmatmul.mubr.f32.gmra.mrb[0].mxu0 %v139
    %v210 = vpop.f32.mrb[0].mxu0
    %v211 = vadd.f32 0.0, %v210
    %v212 = vpop.f32.mrb[0].mxu0
    %213 = vdwg.mxu0
    %v214 = vpack.c.bf16 %v58, %v58
    %v215 = vld [vmem:[#allocation5] sm:$0xf]
    %v216 = vld [vmem:[#allocation5 + $0x4] sm:$0xf]
    %v219 = vunpack.c.l.b16 %v215
    %v220 = vunpack.c.l.b16 %v216
    %v221 = vpack.c.b16 %v220, %v219
    %v224 = vsel %vm63, %v214, 0
    %226 = vmatprep.subr.bf16.mxu0 0
    %227 = vmatpush1.bf16.msra.mxu0 %v221
    %228 = vmatprep.subr.bf16.mxu0 0
    %229 = vmatpush1.bf16.msra.mxu0 0
    %230 = vmatprep.subr.bf16.mxu0 0
    %231 = vmatpush1.bf16.msra.mxu0 0
    %232 = vmatprep.subr.bf16.mxu0 0
    %233 = vmatpush1.bf16.msra.mxu0 0
    %234 = vmatprep.subr.bf16.mxu0 0
    %235 = vmatpush1.bf16.msra.mxu0 0
    %236 = vmatprep.subr.bf16.mxu0 0
    %237 = vmatpush1.bf16.msra.mxu0 0
    %238 = vmatprep.subr.bf16.mxu0 0
    %239 = vmatpush1.bf16.msra.mxu0 0
    %240 = vmatprep.subr.bf16.mxu0 0
    %241 = vmatpush1.bf16.msra.mxu0 0
    %242 = vmatprep.subr.bf16.mxu0 0
    %243 = vmatpush1.bf16.msra.mxu0 0
    %244 = vmatprep.subr.bf16.mxu0 0
    %245 = vmatpush1.bf16.msra.mxu0 0
    %246 = vmatprep.subr.bf16.mxu0 0
    %247 = vmatpush1.bf16.msra.mxu0 0
    %248 = vmatprep.subr.bf16.mxu0 0
    %249 = vmatpush1.bf16.msra.mxu0 0
    %250 = vmatprep.subr.bf16.mxu0 0
    %251 = vmatpush1.bf16.msra.mxu0 0
    %252 = vmatprep.subr.bf16.mxu0 0
    %253 = vmatpush1.bf16.msra.mxu0 0
    %254 = vmatprep.subr.bf16.mxu0 0
    %255 = vmatpush1.bf16.msra.mxu0 0
    %256 = vmatprep.subr.bf16.mxu0 0
    %257 = vmatpush1.bf16.msra.mxu0 0
    %258 = vmatprep.mubr.bf16.mxu0 0
    %259 = vmatmul.mubr.bf16.gmra.mrb[0].mxu0 %v224
    %v260 = vpop.f32.mrb[0].mxu0
    %v261 = vadd.f32 0.0, %v260
    %v262 = vpop.f32.mrb[0].mxu0
    %v263 = vpop.f32.mrb[0].mxu0
    %v264 = vpop.f32.mrb[0].mxu0
    %265 = vdwg.mxu0
    %v266 = vpack.c.bf16 %v261, %v261
    %268 = vset.pattern.permute.xlu0 0
    %269 = vperm.xlu0 %268, %v134
    %v270 = vpop.permute.xlu0 %269
    %v272 = vlaneseq
    %v273 = vshrl.u32 %v272, 7
    %v274 = vsub.s32 0, %v273
    %v275 = vrot.slane %v211, %v274
    %v276 = vadd.f32 %v270, %v275
    %vm277 = vcmp.gt.f32.partialorder %v276, 0.0
    %v278 = vmul.f32 %v276, 0.2
    %v279 = vsel %vm277, %v276, %v278
    %v280 = vsel %vm60, %v279, -9e+15
    %v281 = vld [vmem:[#allocation2] sm:$0xff]
    %vm282 = vcmask 64512
    %v283 = vsel %vm282, %v280, -inf
    %284 = vmax.xlane.f32.xlu0 %v283
    %v285 = vpop.xlane.xlu0 %284
    %v286 = vmax.f32 %v281, %v285
    %v287 = vsub.f32 %v281, %v286
    %v288 = vmul.f32 %v287, 1.442695
    %v289 = vpow.pop %v288
    %291 = vset.pattern.permute.xlu0 0
    %292 = vperm.xlu0 %291, %v286
    %v293 = vpop.permute.xlu0 %292
    %v295 = vsub.f32 %v280, %v293
    %v296 = vmul.f32 %v295, 1.442695
    %v297 = vpow.pop %v296
    %v298 = vld [vmem:[#allocation3] sm:$0xff]
    %v299 = vmul.f32 %v289, %v298
    %v300 = vsel %vm282, %v297, 0.0
    %301 = vadd.xlane.f32.xlu0 %v300
    %v302 = vpop.xlane.xlu0 %301
    %v303 = vadd.f32 %v299, %v302
    %vm304 = vcmask 7168
    %305 = vst.msk [vmem:[#allocation3] sm:$0xff] %vm304, %v303
    %v306 = vld [vmem:[#allocation4] sm:$0xff]
    %308 = vset.pattern.permute.xlu0 0
    %309 = vperm.xlu0 %308, %v289
    %v310 = vpop.permute.xlu0 %309
    %v312 = vmul.f32 %v310, %v306
    %v313 = vpack.c.bf16 %v297, %v297
    %v315 = vsel %vm282, %v313, 0
    %vm317 = vcmask 1043456
    %v319 = vsel %vm317, %v266, 0
    %321 = vmatprep.subr.bf16.mxu0 0
    %322 = vmatpush1.bf16.msra.mxu0 %v319
    %323 = vmatprep.subr.bf16.mxu0 0
    %324 = vmatpush1.bf16.msra.mxu0 0
    %325 = vmatprep.subr.bf16.mxu0 0
    %326 = vmatpush1.bf16.msra.mxu0 0
    %327 = vmatprep.subr.bf16.mxu0 0
    %328 = vmatpush1.bf16.msra.mxu0 0
    %329 = vmatprep.subr.bf16.mxu0 0
    %330 = vmatpush1.bf16.msra.mxu0 0
    %331 = vmatprep.subr.bf16.mxu0 0
    %332 = vmatpush1.bf16.msra.mxu0 0
    %333 = vmatprep.subr.bf16.mxu0 0
    %334 = vmatpush1.bf16.msra.mxu0 0
    %335 = vmatprep.subr.bf16.mxu0 0
    %336 = vmatpush1.bf16.msra.mxu0 0
    %337 = vmatprep.subr.bf16.mxu0 0
    %338 = vmatpush1.bf16.msra.mxu0 0
    %339 = vmatprep.subr.bf16.mxu0 0
    %340 = vmatpush1.bf16.msra.mxu0 0
    %341 = vmatprep.subr.bf16.mxu0 0
    %342 = vmatpush1.bf16.msra.mxu0 0
    %343 = vmatprep.subr.bf16.mxu0 0
    %344 = vmatpush1.bf16.msra.mxu0 0
    %345 = vmatprep.subr.bf16.mxu0 0
    %346 = vmatpush1.bf16.msra.mxu0 0
    %347 = vmatprep.subr.bf16.mxu0 0
    %348 = vmatpush1.bf16.msra.mxu0 0
    %349 = vmatprep.subr.bf16.mxu0 0
    %350 = vmatpush1.bf16.msra.mxu0 0
    %351 = vmatprep.subr.bf16.mxu0 0
    %352 = vmatpush1.bf16.msra.mxu0 0
    %353 = vmatprep.mubr.bf16.mxu0 0
    %354 = vmatmul.mubr.bf16.gmra.mrb[0].mxu0 %v315
    %v355 = vpop.f32.mrb[0].mxu0
    %v356 = vadd.f32 0.0, %v355
    %v357 = vpop.f32.mrb[0].mxu0
    %v358 = vpop.f32.mrb[0].mxu0
    %v359 = vpop.f32.mrb[0].mxu0
    %360 = vdwg.mxu0
    %v361 = vadd.f32 %v312, %v356
    %vm362 = vcmask 261120
    %363 = vst.msk [vmem:[#allocation4] sm:$0xff] %vm362, %v361
    %364 = vst.msk [vmem:[#allocation2] sm:$0xff] %vm304, %v286
    %365 = vset.pattern.permute.xlu0 1
    %366 = vperm.xlu0 %365, %v134
    %v367 = vpop.permute.xlu0 %366
    %v369 = vlaneseq
    %v370 = vshrl.u32 %v369, 7
    %v371 = vsub.s32 1, %v370
    %v372 = vrot.slane %v211, %v371
    %v373 = vadd.f32 %v367, %v372
    %vm374 = vcmp.gt.f32.partialorder %v373, 0.0
    %v375 = vmul.f32 %v373, 0.2
    %v376 = vsel %vm374, %v373, %v375
    %v377 = vsel %vm60, %v376, -9e+15
    %s378 = scalar_lea.vmem [#allocation2], 8
    %v379 = vld [vmem:[%s378] sm:$0xff]
    %v380 = vsel %vm282, %v377, -inf
    %381 = vmax.xlane.f32.xlu0 %v380
    %v382 = vpop.xlane.xlu0 %381
    %v383 = vmax.f32 %v379, %v382
    %v384 = vsub.f32 %v379, %v383
    %v385 = vmul.f32 %v384, 1.442695
    %v386 = vpow.pop %v385
    %388 = vset.pattern.permute.xlu0 0
    %389 = vperm.xlu0 %388, %v383
    %v390 = vpop.permute.xlu0 %389
    %v392 = vsub.f32 %v377, %v390
    %v393 = vmul.f32 %v392, 1.442695
    %v394 = vpow.pop %v393
    %s395 = scalar_lea.vmem [#allocation3], 8
    %v396 = vld [vmem:[%s395] sm:$0xff]
    %v397 = vmul.f32 %v386, %v396
    %v398 = vsel %vm282, %v394, 0.0
    %399 = vadd.xlane.f32.xlu0 %v398
    %v400 = vpop.xlane.xlu0 %399
    %v401 = vadd.f32 %v397, %v400
    %402 = vst.msk [vmem:[%s395] sm:$0xff] %vm304, %v401
    %s403 = scalar_lea.vmem [#allocation4], 8
    %v404 = vld [vmem:[%s403] sm:$0xff]
    %406 = vset.pattern.permute.xlu0 0
    %407 = vperm.xlu0 %406, %v386
    %v408 = vpop.permute.xlu0 %407
    %v410 = vmul.f32 %v408, %v404
    %v411 = vpack.c.bf16 %v394, %v394
    %413 = vrot.lane.b32.xlu0 %v266, 96
    %v414 = vpop.permute.xlu0 %413
    %v416 = vsel %vm282, %v411, 0
    %v419 = vsel %vm317, %v414, 0
    %421 = vmatprep.subr.bf16.mxu0 0
    %422 = vmatpush1.bf16.msra.mxu0 %v419
    %423 = vmatprep.subr.bf16.mxu0 0
    %424 = vmatpush1.bf16.msra.mxu0 0
    %425 = vmatprep.subr.bf16.mxu0 0
    %426 = vmatpush1.bf16.msra.mxu0 0
    %427 = vmatprep.subr.bf16.mxu0 0
    %428 = vmatpush1.bf16.msra.mxu0 0
    %429 = vmatprep.subr.bf16.mxu0 0
    %430 = vmatpush1.bf16.msra.mxu0 0
    %431 = vmatprep.subr.bf16.mxu0 0
    %432 = vmatpush1.bf16.msra.mxu0 0
    %433 = vmatprep.subr.bf16.mxu0 0
    %434 = vmatpush1.bf16.msra.mxu0 0
    %435 = vmatprep.subr.bf16.mxu0 0
    %436 = vmatpush1.bf16.msra.mxu0 0
    %437 = vmatprep.subr.bf16.mxu0 0
    %438 = vmatpush1.bf16.msra.mxu0 0
    %439 = vmatprep.subr.bf16.mxu0 0
    %440 = vmatpush1.bf16.msra.mxu0 0
    %441 = vmatprep.subr.bf16.mxu0 0
    %442 = vmatpush1.bf16.msra.mxu0 0
    %443 = vmatprep.subr.bf16.mxu0 0
    %444 = vmatpush1.bf16.msra.mxu0 0
    %445 = vmatprep.subr.bf16.mxu0 0
    %446 = vmatpush1.bf16.msra.mxu0 0
    %447 = vmatprep.subr.bf16.mxu0 0
    %448 = vmatpush1.bf16.msra.mxu0 0
    %449 = vmatprep.subr.bf16.mxu0 0
    %450 = vmatpush1.bf16.msra.mxu0 0
    %451 = vmatprep.subr.bf16.mxu0 0
    %452 = vmatpush1.bf16.msra.mxu0 0
    %453 = vmatprep.mubr.bf16.mxu0 0
    %454 = vmatmul.mubr.bf16.gmra.mrb[0].mxu0 %v416
    %v455 = vpop.f32.mrb[0].mxu0
    %v456 = vadd.f32 0.0, %v455
    %v457 = vpop.f32.mrb[0].mxu0
    %v458 = vpop.f32.mrb[0].mxu0
    %v459 = vpop.f32.mrb[0].mxu0
    %460 = vdwg.mxu0
    %v461 = vadd.f32 %v410, %v456
    %462 = vst.msk [vmem:[%s403] sm:$0xff] %vm362, %v461
    %463 = vst.msk [vmem:[%s378] sm:$0xff] %vm304, %v383
    %464 = vset.pattern.permute.xlu0 2
    %465 = vperm.xlu0 %464, %v134
    %v466 = vpop.permute.xlu0 %465
    %v468 = vlaneseq
    %v469 = vshrl.u32 %v468, 7
    %v470 = vsub.s32 2, %v469
    %v471 = vrot.slane %v211, %v470
    %v472 = vadd.f32 %v466, %v471
    %vm473 = vcmp.gt.f32.partialorder %v472, 0.0
    %v474 = vmul.f32 %v472, 0.2
    %v475 = vsel %vm473, %v472, %v474
    %v476 = vsel %vm60, %v475, -9e+15
    %s477 = scalar_lea.vmem [#allocation2], 16
    %v478 = vld [vmem:[%s477] sm:$0xff]
    %v479 = vsel %vm282, %v476, -inf
    %480 = vmax.xlane.f32.xlu0 %v479
    %v481 = vpop.xlane.xlu0 %480
    %v482 = vmax.f32 %v478, %v481
    %v483 = vsub.f32 %v478, %v482
    %v484 = vmul.f32 %v483, 1.442695
    %v485 = vpow.pop %v484
    %487 = vset.pattern.permute.xlu0 0
    %488 = vperm.xlu0 %487, %v482
    %v489 = vpop.permute.xlu0 %488
    %v491 = vsub.f32 %v476, %v489
    %v492 = vmul.f32 %v491, 1.442695
    %v493 = vpow.pop %v492
    %s494 = scalar_lea.vmem [#allocation3], 16
    %v495 = vld [vmem:[%s494] sm:$0xff]
    %v496 = vmul.f32 %v485, %v495
    %v497 = vsel %vm282, %v493, 0.0
    %498 = vadd.xlane.f32.xlu0 %v497
    %v499 = vpop.xlane.xlu0 %498
    %v500 = vadd.f32 %v496, %v499
    %501 = vst.msk [vmem:[%s494] sm:$0xff] %vm304, %v500
    %s502 = scalar_lea.vmem [#allocation4], 16
    %v503 = vld [vmem:[%s502] sm:$0xff]
    %505 = vset.pattern.permute.xlu0 0
    %506 = vperm.xlu0 %505, %v485
    %v507 = vpop.permute.xlu0 %506
    %v509 = vmul.f32 %v507, %v503
    %v510 = vpack.c.bf16 %v493, %v493
    %511 = vrot.lane.b32.xlu0 %v266, 64
    %v512 = vpop.permute.xlu0 %511
    %v514 = vsel %vm282, %v510, 0
    %v517 = vsel %vm317, %v512, 0
    %519 = vmatprep.subr.bf16.mxu0 0
    %520 = vmatpush1.bf16.msra.mxu0 %v517
    %521 = vmatprep.subr.bf16.mxu0 0
    %522 = vmatpush1.bf16.msra.mxu0 0
    %523 = vmatprep.subr.bf16.mxu0 0
    %524 = vmatpush1.bf16.msra.mxu0 0
    %525 = vmatprep.subr.bf16.mxu0 0
    %526 = vmatpush1.bf16.msra.mxu0 0
    %527 = vmatprep.subr.bf16.mxu0 0
    %528 = vmatpush1.bf16.msra.mxu0 0
    %529 = vmatprep.subr.bf16.mxu0 0
    %530 = vmatpush1.bf16.msra.mxu0 0
    %531 = vmatprep.subr.bf16.mxu0 0
    %532 = vmatpush1.bf16.msra.mxu0 0
    %533 = vmatprep.subr.bf16.mxu0 0
    %534 = vmatpush1.bf16.msra.mxu0 0
    %535 = vmatprep.subr.bf16.mxu0 0
    %536 = vmatpush1.bf16.msra.mxu0 0
    %537 = vmatprep.subr.bf16.mxu0 0
    %538 = vmatpush1.bf16.msra.mxu0 0
    %539 = vmatprep.subr.bf16.mxu0 0
    %540 = vmatpush1.bf16.msra.mxu0 0
    %541 = vmatprep.subr.bf16.mxu0 0
    %542 = vmatpush1.bf16.msra.mxu0 0
    %543 = vmatprep.subr.bf16.mxu0 0
    %544 = vmatpush1.bf16.msra.mxu0 0
    %545 = vmatprep.subr.bf16.mxu0 0
    %546 = vmatpush1.bf16.msra.mxu0 0
    %547 = vmatprep.subr.bf16.mxu0 0
    %548 = vmatpush1.bf16.msra.mxu0 0
    %549 = vmatprep.subr.bf16.mxu0 0
    %550 = vmatpush1.bf16.msra.mxu0 0
    %551 = vmatprep.mubr.bf16.mxu0 0
    %552 = vmatmul.mubr.bf16.gmra.mrb[0].mxu0 %v514
    %v553 = vpop.f32.mrb[0].mxu0
    %v554 = vadd.f32 0.0, %v553
    %v555 = vpop.f32.mrb[0].mxu0
    %v556 = vpop.f32.mrb[0].mxu0
    %v557 = vpop.f32.mrb[0].mxu0
    %558 = vdwg.mxu0
    %v559 = vadd.f32 %v509, %v554
    %560 = vst.msk [vmem:[%s502] sm:$0xff] %vm362, %v559
    %561 = vst.msk [vmem:[%s477] sm:$0xff] %vm304, %v482
    %562 = vset.pattern.permute.xlu0 3
    %563 = vperm.xlu0 %562, %v134
    %v564 = vpop.permute.xlu0 %563
    %v566 = vlaneseq
    %v567 = vshrl.u32 %v566, 7
    %v568 = vsub.s32 3, %v567
    %v569 = vrot.slane %v211, %v568
    %v570 = vadd.f32 %v564, %v569
    %vm571 = vcmp.gt.f32.partialorder %v570, 0.0
    %v572 = vmul.f32 %v570, 0.2
    %v573 = vsel %vm571, %v570, %v572
    %v574 = vsel %vm60, %v573, -9e+15
    %s575 = scalar_lea.vmem [#allocation2], 24
    %v576 = vld [vmem:[%s575] sm:$0xff]
    %v577 = vsel %vm282, %v574, -inf
    %578 = vmax.xlane.f32.xlu0 %v577
    %v579 = vpop.xlane.xlu0 %578
    %v580 = vmax.f32 %v576, %v579
    %v581 = vsub.f32 %v576, %v580
    %v582 = vmul.f32 %v581, 1.442695
    %v583 = vpow.pop %v582
    %585 = vset.pattern.permute.xlu0 0
    %586 = vperm.xlu0 %585, %v580
    %v587 = vpop.permute.xlu0 %586
    %v589 = vsub.f32 %v574, %v587
    %v590 = vmul.f32 %v589, 1.442695
    %v591 = vpow.pop %v590
    %s592 = scalar_lea.vmem [#allocation3], 24
    %v593 = vld [vmem:[%s592] sm:$0xff]
    %v594 = vmul.f32 %v583, %v593
    %v595 = vsel %vm282, %v591, 0.0
    %596 = vadd.xlane.f32.xlu0 %v595
    %v597 = vpop.xlane.xlu0 %596
    %v598 = vadd.f32 %v594, %v597
    %599 = vst.msk [vmem:[%s592] sm:$0xff] %vm304, %v598
    %s600 = scalar_lea.vmem [#allocation4], 24
    %v601 = vld [vmem:[%s600] sm:$0xff]
    %603 = vset.pattern.permute.xlu0 0
    %604 = vperm.xlu0 %603, %v583
    %v605 = vpop.permute.xlu0 %604
    %v607 = vmul.f32 %v605, %v601
    %v608 = vpack.c.bf16 %v591, %v591
    %609 = vrot.lane.b32.xlu0 %v266, 32
    %v610 = vpop.permute.xlu0 %609
    %v612 = vsel %vm282, %v608, 0
    %v615 = vsel %vm317, %v610, 0
    %617 = vmatprep.subr.bf16.mxu0 0
    %618 = vmatpush1.bf16.msra.mxu0 %v615
    %619 = vmatprep.subr.bf16.mxu0 0
    %620 = vmatpush1.bf16.msra.mxu0 0
    %621 = vmatprep.subr.bf16.mxu0 0
    %622 = vmatpush1.bf16.msra.mxu0 0
    %623 = vmatprep.subr.bf16.mxu0 0
    %624 = vmatpush1.bf16.msra.mxu0 0
    %625 = vmatprep.subr.bf16.mxu0 0
    %626 = vmatpush1.bf16.msra.mxu0 0
    %627 = vmatprep.subr.bf16.mxu0 0
    %628 = vmatpush1.bf16.msra.mxu0 0
    %629 = vmatprep.subr.bf16.mxu0 0
    %630 = vmatpush1.bf16.msra.mxu0 0
    %631 = vmatprep.subr.bf16.mxu0 0
    %632 = vmatpush1.bf16.msra.mxu0 0
    %633 = vmatprep.subr.bf16.mxu0 0
    %634 = vmatpush1.bf16.msra.mxu0 0
    %635 = vmatprep.subr.bf16.mxu0 0
    %636 = vmatpush1.bf16.msra.mxu0 0
    %637 = vmatprep.subr.bf16.mxu0 0
    %638 = vmatpush1.bf16.msra.mxu0 0
    %639 = vmatprep.subr.bf16.mxu0 0
    %640 = vmatpush1.bf16.msra.mxu0 0
    %641 = vmatprep.subr.bf16.mxu0 0
    %642 = vmatpush1.bf16.msra.mxu0 0
    %643 = vmatprep.subr.bf16.mxu0 0
    %644 = vmatpush1.bf16.msra.mxu0 0
    %645 = vmatprep.subr.bf16.mxu0 0
    %646 = vmatpush1.bf16.msra.mxu0 0
    %647 = vmatprep.subr.bf16.mxu0 0
    %648 = vmatpush1.bf16.msra.mxu0 0
    %649 = vmatprep.mubr.bf16.mxu0 0
    %650 = vmatmul.mubr.bf16.gmra.mrb[0].mxu0 %v612
    %v651 = vpop.f32.mrb[0].mxu0
    %v652 = vadd.f32 0.0, %v651
    %v653 = vpop.f32.mrb[0].mxu0
    %v654 = vpop.f32.mrb[0].mxu0
    %v655 = vpop.f32.mrb[0].mxu0
    %656 = vdwg.mxu0
    %v657 = vadd.f32 %v607, %v652
    %658 = vst.msk [vmem:[%s600] sm:$0xff] %vm362, %v657
    %659 = vst.msk [vmem:[%s575] sm:$0xff] %vm304, %v580
    // Predicated region
    $region34: #{tpu_custom_call.1} parent=1 // pred_check
      %p660 = pneg %p39
    $region35: #{tpu_custom_call.1} parent=1 // pred_check_branch
      %662 = sbr.rel (%p660) target = $region37
    $region36: #{tpu_custom_call.1} parent=1 // pred_region
      %v663 = vld [vmem:[#allocation3] sm:$0xff]
      %v664 = vrcp.pop %v663
      %v665 = vld [vmem:[#allocation4] sm:$0xff]
      %667 = vset.pattern.permute.xlu0 0
      %668 = vperm.xlu0 %667, %v664
      %v669 = vpop.permute.xlu0 %668
      %v671 = vmul.f32 %v665, %v669
      %vm672 = vcmp.gt.f32.partialorder %v671, 0.0
      %v673 = vmin.f32 %v671, 0.0
      %v674 = vmul.f32 %v673, 1.442695
      %v675 = vpow.pop %v674
      %v676 = vsub.f32 %v675, 1.0
      %v677 = vsel %vm672, %v671, %v676
      %678 = vst.msk [vmem:[#allocation8] sm:$0xff] %vm362, %v677
      %v679 = vld [vmem:[%s395] sm:$0xff]
      %v680 = vrcp.pop %v679
      %v681 = vld [vmem:[%s403] sm:$0xff]
      %683 = vset.pattern.permute.xlu0 0
      %684 = vperm.xlu0 %683, %v680
      %v685 = vpop.permute.xlu0 %684
      %v687 = vmul.f32 %v681, %v685
      %vm688 = vcmp.gt.f32.partialorder %v687, 0.0
      %v689 = vmin.f32 %v687, 0.0
      %v690 = vmul.f32 %v689, 1.442695
      %v691 = vpow.pop %v690
      %v692 = vsub.f32 %v691, 1.0
      %v693 = vsel %vm688, %v687, %v692
      %695 = vrot.lane.b32.xlu0 %v693, 32
      %v696 = vpop.permute.xlu0 %695
      %vm698 = vcmask 523520
      %699 = vst.msk [vmem:[#allocation8] sm:$0xff] %vm698, %v696
      %v700 = vld [vmem:[%s494] sm:$0xff]
      %v701 = vrcp.pop %v700
      %v702 = vld [vmem:[%s502] sm:$0xff]
      %704 = vset.pattern.permute.xlu0 0
      %705 = vperm.xlu0 %704, %v701
      %v706 = vpop.permute.xlu0 %705
      %v708 = vmul.f32 %v702, %v706
      %vm709 = vcmp.gt.f32.partialorder %v708, 0.0
      %v710 = vmin.f32 %v708, 0.0
      %v711 = vmul.f32 %v710, 1.442695
      %v712 = vpow.pop %v711
      %v713 = vsub.f32 %v712, 1.0
      %v714 = vsel %vm709, %v708, %v713
      %716 = vrot.lane.b32.xlu0 %v714, 64
      %v717 = vpop.permute.xlu0 %716
      %vm719 = vcmask 785920
      %720 = vst.msk [vmem:[#allocation8] sm:$0xff] %vm719, %v717
      %v721 = vld [vmem:[%s592] sm:$0xff]
      %v722 = vrcp.pop %v721
      %v723 = vld [vmem:[%s600] sm:$0xff]
      %725 = vset.pattern.permute.xlu0 0
      %726 = vperm.xlu0 %725, %v722
      %v727 = vpop.permute.xlu0 %726
      %v729 = vmul.f32 %v723, %v727
      %vm730 = vcmp.gt.f32.partialorder %v729, 0.0
      %v731 = vmin.f32 %v729, 0.0
      %v732 = vmul.f32 %v731, 1.442695
      %v733 = vpow.pop %v732
      %v734 = vsub.f32 %v733, 1.0
      %v735 = vsel %vm730, %v729, %v734
      %737 = vrot.lane.b32.xlu0 %v735, 96
      %v738 = vpop.permute.xlu0 %737
      %vm740 = vcmask 1048320
      %741 = vst.msk [vmem:[#allocation8] sm:$0xff] %vm740, %v738
    $region37: #{tpu_custom_call.1} parent=1 // pred_fallthru
      _
    // Predicated region
    $region38: #{tpu_custom_call.1} parent=1 // pred_check
      _
    $region39: #{tpu_custom_call.1} parent=1 // pred_check_branch
      %743 = sbr.rel (0) target = $region41
    $region40: #{tpu_custom_call.1} parent=1 // pred_region
      %s745 = ssub.s32 128, 128
      %746 = vsyncadd [#allocation7], %s745
      %s748 = sshll.u32 [#allocation8], 4
      %s749 = int_to_ptr.vmem [resolvable:$true] %s748
      %751 = dma.vmem_to_hbm [thread:$0]  %s749, 128, %s6, [#allocation7]
    $region41: #{tpu_custom_call.1} parent=1 // pred_fallthru
      _
    // Predicated region
    $region42: #{tpu_custom_call.1} parent=1 // pred_check
      _
    $region43: #{tpu_custom_call.1} parent=1 // pred_check_branch
      %753 = sbr.rel (0) target = $region45
    $region44: #{tpu_custom_call.1} parent=1 // pred_region
      %754 = dma.done [#allocation7], 128
    $region45: #{tpu_custom_call.1} parent=1 // pred_fallthru
      _
    %755 = vsyncpa [#allocation6], 1
    %756 = vsyncpa [#allocation7], 1

</llo_original>
